<compile_context>
chip_gen: v6e
topology: v6e:2x2x1
jax: 0.10.0
libtpu: 0.0.40
codegen_flags: <defaults>
</compile_context>

<pallas_src>
import functools

import numpy as np
import jax
import jax.numpy as jnp
from jax.experimental import pallas as pl
from jax.experimental.pallas import tpu as pltpu


# ---------------------------------------------------------------------------
# synthetic cfg (the real module reads these from a global cfg object)
# ---------------------------------------------------------------------------
FPN_ANCHOR_SCALES = [8.0, 16.0, 32.0, 64.0]
FPN_FEAT_STRIDES = [4.0, 8.0, 16.0, 32.0]
FPN_ANCHOR_STRIDE = 1
ANCHOR_RATIOS = [0.5, 1.0, 2.0]
CFG = {"TEST": {"RPN_POST_NMS_TOP_N": 16, "RPN_NMS_THRESH": 0.7, "RPN_MIN_SIZE": 16}}

_LANE = 128                       # TPU lane width; NMS tile size
_PAD_UNIT = 8 * _LANE             # pad anchor axis to a multiple of 1024
_VMEM_LIMIT = 32 * 1024 * 1024    # safe on v5e/v6e (128 MiB) and v7x (64 MiB)


# ---------------------------------------------------------------------------
# anchor generation (glue, numpy) — generate_anchors_all_pyramids equivalent
# ---------------------------------------------------------------------------
def generate_anchors_all_pyramids(scales, ratios, feat_shapes, feat_strides,
                                  anchor_stride):
    all_anchors, all_level_ids = [], []
    for lvl, (scale, stride, (fh, fw)) in enumerate(
            zip(scales, feat_strides, feat_shapes)):
        r = np.asarray(ratios, np.float32)
        ws = scale * np.sqrt(1.0 / r)
        hs = scale * np.sqrt(r)
        ys = np.arange(0, fh, anchor_stride, dtype=np.float32) * stride
        xs = np.arange(0, fw, anchor_stride, dtype=np.float32) * stride
        cx, cy = np.meshgrid(xs, ys)
        cx = cx.reshape(-1, 1)
        cy = cy.reshape(-1, 1)
        ws_b = np.broadcast_to(ws[None, :], (cx.shape[0], r.shape[0]))
        hs_b = np.broadcast_to(hs[None, :], (cx.shape[0], r.shape[0]))
        cx_b = np.broadcast_to(cx, ws_b.shape)
        cy_b = np.broadcast_to(cy, hs_b.shape)
        anc = np.stack([cx_b - 0.5 * (ws_b - 1.0),
                        cy_b - 0.5 * (hs_b - 1.0),
                        cx_b + 0.5 * (ws_b - 1.0),
                        cy_b + 0.5 * (hs_b - 1.0)], axis=-1).reshape(-1, 4)
        all_anchors.append(anc.astype(np.float32))
        all_level_ids.append(np.full((anc.shape[0],), lvl, np.int32))
    return np.concatenate(all_anchors, 0), np.concatenate(all_level_ids, 0)


# ---------------------------------------------------------------------------
# Pallas kernel 1: bbox_transform_inv + clip_boxes (lane-dense coord planes)
# ---------------------------------------------------------------------------
def _decode_clip_kernel(im_info_ref, anchors_ref, deltas_ref, out_ref):
    # im_info_ref: (B, 3) in SMEM, row = [H, W, scale]
    # anchors_ref: (4, TSN); deltas_ref / out_ref: (1, 4, TSN)
    b = pl.program_id(0)
    im_h = im_info_ref[b, 0]
    im_w = im_info_ref[b, 1]

    ax1 = anchors_ref[0:1, :]
    ay1 = anchors_ref[1:2, :]
    ax2 = anchors_ref[2:3, :]
    ay2 = anchors_ref[3:4, :]
    dx = deltas_ref[0, 0:1, :]
    dy = deltas_ref[0, 1:2, :]
    dw = deltas_ref[0, 2:3, :]
    dh = deltas_ref[0, 3:4, :]

    widths = ax2 - ax1 + 1.0
    heights = ay2 - ay1 + 1.0
    ctr_x = ax1 + 0.5 * widths
    ctr_y = ay1 + 0.5 * heights

    pred_ctr_x = dx * widths + ctr_x
    pred_ctr_y = dy * heights + ctr_y
    pred_w = jnp.exp(dw) * widths
    pred_h = jnp.exp(dh) * heights

    out_ref[0, 0:1, :] = jnp.clip(pred_ctr_x - 0.5 * pred_w, 0.0, im_w - 1.0)
    out_ref[0, 1:2, :] = jnp.clip(pred_ctr_y - 0.5 * pred_h, 0.0, im_h - 1.0)
    out_ref[0, 2:3, :] = jnp.clip(pred_ctr_x + 0.5 * pred_w, 0.0, im_w - 1.0)
    out_ref[0, 3:4, :] = jnp.clip(pred_ctr_y + 0.5 * pred_h, 0.0, im_h - 1.0)


def decode_and_clip(im_info, anchors_t, deltas_t):
    """anchors_t: (4, N_pad); deltas_t: (B, 4, N_pad) -> (B, 4, N_pad)."""
    B, _, n_pad = deltas_t.shape
    assert n_pad % _PAD_UNIT == 0
    tsn = _PAD_UNIT
    for mult in (8, 4, 2):
        if n_pad % (_PAD_UNIT * mult) == 0:
            tsn = _PAD_UNIT * mult
            break
    tsn = min(tsn, n_pad)

    return pl.pallas_call(
        _decode_clip_kernel,
        out_shape=jax.ShapeDtypeStruct((B, 4, n_pad), jnp.float32),
        grid=(B, n_pad // tsn),
        in_specs=[
            pl.BlockSpec(memory_space=pltpu.MemorySpace.SMEM),     # im_info (B,3)
            pl.BlockSpec((4, tsn), lambda b, n: (0, n)),           # shared anchors
            pl.BlockSpec((1, 4, tsn), lambda b, n: (b, 0, n)),
        ],
        out_specs=pl.BlockSpec((1, 4, tsn), lambda b, n: (b, 0, n)),
        compiler_params=pltpu.CompilerParams(
            dimension_semantics=("parallel", "parallel"),
            vmem_limit_bytes=_VMEM_LIMIT),
        cost_estimate=pl.CostEstimate(
            flops=int(30 * B * n_pad),
            transcendentals=int(2 * B * n_pad),
            bytes_accessed=int(4 * (2 * B * 4 * n_pad + 4 * n_pad))),
    )(im_info, anchors_t, deltas_t)


# ---------------------------------------------------------------------------
# Pallas kernel 2: fused suppressor-outer greedy batched NMS (per batch)
# ---------------------------------------------------------------------------
def _make_nms_kernel(nblk, nms_thresh):
    ts = _LANE

    def kernel(boxes_ref, keep_ref, supp_ref, area_ref):
        # boxes_ref: (1, 4, N)  sorted + level-offset boxes, lane-major planes
        # keep_ref : (1, 1, N)  output keep flags (1.0 / 0.0), lane-dense
        # supp_ref : (1, N)     scratch: accumulated suppression counts
        # area_ref : (1, N)     scratch: per-box areas (hoisted once)
        x1 = boxes_ref[0, 0:1, :]
        y1 = boxes_ref[0, 1:2, :]
        x2 = boxes_ref[0, 2:3, :]
        y2 = boxes_ref[0, 3:4, :]
        area_ref[...] = (x2 - x1) * (y2 - y1)
        supp_ref[...] = jnp.zeros_like(supp_ref)

        sub2 = jax.lax.broadcasted_iota(jnp.int32, (ts, ts), 0)
        lane2 = jax.lax.broadcasted_iota(jnp.int32, (ts, ts), 1)
        eye = sub2 == lane2
        tri = (sub2 < lane2).astype(jnp.float32)   # earlier (sublane) suppresses later (lane)
        lane1 = jax.lax.broadcasted_iota(jnp.int32, (1, ts), 1)

        def to_col(row):
            # (1, ts) -> (ts, 1) without lax.transpose: sublane-broadcast, mask
            # with the identity pattern, lane-reduce (all guaranteed lowerings).
            full = jnp.broadcast_to(row, (ts, ts))
            return jnp.sum(jnp.where(eye, full, 0.0), axis=1, keepdims=True)

        def tile_body(s, carry):
            s_off = pl.multiple_of(s * ts, ts)

            # suppressor tile s: lane-major rows + on-chip column derivation
            rx1 = boxes_ref[0, 0:1, pl.ds(s_off, ts)]
            ry1 = boxes_ref[0, 1:2, pl.ds(s_off, ts)]
            rx2 = boxes_ref[0, 2:3, pl.ds(s_off, ts)]
            ry2 = boxes_ref[0, 3:4, pl.ds(s_off, ts)]
            area_row_s = area_ref[0:1, pl.ds(s_off, ts)]
            sx1, sy1 = to_col(rx1), to_col(ry1)
            sx2, sy2 = to_col(rx2), to_col(ry2)
            area_col_s = to_col(area_row_s)

            def iou_gt(tx1, ty1, tx2, ty2, area_row_t):
                # suppressors of tile s on sublanes vs given suppressee rows on lanes
                xx1 = jnp.maximum(sx1, tx1)
                yy1 = jnp.maximum(sy1, ty1)
                xx2 = jnp.minimum(sx2, tx2)
                yy2 = jnp.minimum(sy2, ty2)
                w = jnp.maximum(xx2 - xx1, 0.0)
                h = jnp.maximum(yy2 - yy1, 0.0)
                inter = w * h
                union = area_col_s + area_row_t - inter
                # thresholded compare: no divide (mmcv nms, offset=0 convention)
                return (inter > nms_thresh * union).astype(jnp.float32)

            # ---- within-tile greedy: serial scan, zero MXU round-trips ------
            mask_self = iou_gt(rx1, ry1, rx2, ry2, area_row_s) * tri   # (ts, ts)
            cnt0 = supp_ref[0:1, pl.ds(s_off, ts)]                     # cross counts

            def scan_step(p, state):
                cnt, keep_row = state
                onehot = (lane1 == p).astype(jnp.float32)              # (1, ts)
                kp = jnp.sum(jnp.where(cnt <= 0.0, onehot, 0.0),
                             axis=1, keepdims=True)                    # (1, 1)
                row_p = jnp.sum(jnp.where(sub2 == p, mask_self, 0.0),
                                axis=0, keepdims=True)                 # (1, ts)
                return cnt + kp * row_p, keep_row + kp * onehot

            _, keep_row = jax.lax.fori_loop(
                0, ts, scan_step, (cnt0, jnp.zeros((1, ts), jnp.float32)))
            keep_ref[0, 0:1, pl.ds(s_off, ts)] = keep_row

            # ---- cross phase: accumulate raw counts onto all later tiles ----
            keep_bf = jnp.broadcast_to(keep_row.astype(jnp.bfloat16), (8, ts))

            def cross_body(t, inner):
                t_off = pl.multiple_of(t * ts, ts)
                tx1 = boxes_ref[0, 0:1, pl.ds(t_off, ts)]
                ty1 = boxes_ref[0, 1:2, pl.ds(t_off, ts)]
                tx2 = boxes_ref[0, 2:3, pl.ds(t_off, ts)]
                ty2 = boxes_ref[0, 3:4, pl.ds(t_off, ts)]
                area_row_t = area_ref[0:1, pl.ds(t_off, ts)]
                m_bf = iou_gt(tx1, ty1, tx2, ty2, area_row_t).astype(jnp.bfloat16)
                cnt_t = jnp.dot(keep_bf, m_bf,
                                preferred_element_type=jnp.float32)[0:1, :]
                supp_ref[0:1, pl.ds(t_off, ts)] = (
                    supp_ref[0:1, pl.ds(t_off, ts)] + cnt_t)
                return inner

            jax.lax.fori_loop(s + 1, nblk, cross_body, 0)
            return carry

        jax.lax.fori_loop(0, nblk, tile_body, 0)

    return kernel


def batched_nms_keep(boxes_rows, nms_thresh):
    """boxes_rows: (B, 4, N_pad) sorted + offset boxes -> keep flags (B, N_pad)."""
    B, _, n_pad = boxes_rows.shape
    nblk = n_pad // _LANE
    pairs = nblk * (nblk + 1) // 2
    flops = int(B * (pairs * 18 * _LANE * _LANE
                     + (pairs - nblk) * 2 * 8 * _LANE * _LANE))
    out = pl.pallas_call(
        _make_nms_kernel(nblk, float(nms_thresh)),
        out_shape=jax.ShapeDtypeStruct((B, 1, n_pad), jnp.float32),
        grid=(B,),   # NOTE(v7x): keep B >= 2 so both TensorCores are busy
        in_specs=[pl.BlockSpec((1, 4, n_pad), lambda b: (b, 0, 0))],
        out_specs=pl.BlockSpec((1, 1, n_pad), lambda b: (b, 0, 0)),
        scratch_shapes=[pltpu.VMEM((1, n_pad), jnp.float32),   # supp counts
                        pltpu.VMEM((1, n_pad), jnp.float32)],  # areas
        compiler_params=pltpu.CompilerParams(
            dimension_semantics=("parallel",),
            vmem_limit_bytes=_VMEM_LIMIT),
        cost_estimate=pl.CostEstimate(
            flops=flops, transcendentals=0,
            bytes_accessed=int(4 * B * (4 * n_pad + n_pad))),
    )(boxes_rows)
    return out[:, 0, :]


# ---------------------------------------------------------------------------
# Full forward (glue + kernels)
# ---------------------------------------------------------------------------
@functools.partial(jax.jit, static_argnums=(5, 6))
def proposal_layer_fpn_forward(scores_in, bbox_deltas, im_info, anchors, ids,
                               post_nms_topN, nms_thresh):
    # scores = input[0][:, :, 0]
    scores = scores_in[:, :, 0]
    B, N = scores.shape

    # pad the anchor axis to a multiple of 1024; padded entries get -inf score
    # so they sort last (never suppress real boxes) and are masked from output.
    n_pad = ((N + _PAD_UNIT - 1) // _PAD_UNIT) * _PAD_UNIT
    pad = n_pad - N
    scores_p = jnp.pad(scores, ((0, 0), (0, pad)), constant_values=-jnp.inf)
    ids_p = jnp.pad(ids, (0, pad))
    # planar, lane-dense layouts (single pad+transpose pass, fused by XLA)
    anchors_t = jnp.pad(jnp.transpose(anchors, (1, 0)), ((0, 0), (0, pad)))
    deltas_t = jnp.pad(jnp.transpose(bbox_deltas, (0, 2, 1)),
                       ((0, 0), (0, 0), (0, pad)))

    # 1) Pallas: bbox_transform_inv + clip_boxes -> (B, 4, N_pad)
    proposals_t = decode_and_clip(im_info, anchors_t, deltas_t)

    # TODO(synk): RPN_MIN_SIZE is read but never applied by the reference
    # forward (_filter_boxes is never called), so it is skipped here too.

    # 2) sort by score (desc) + batched-NMS offset trick (per-FPN-level ids)
    order = jnp.argsort(-scores_p, axis=1)                        # (B, N_pad)
    boxes_sorted_t = jnp.take_along_axis(proposals_t, order[:, None, :], axis=2)
    ids_sorted = ids_p[order].astype(jnp.float32)                 # (B, N_pad)
    max_coord = jnp.max(proposals_t, axis=(1, 2), keepdims=True)  # (B, 1, 1)
    boxes_nms_t = boxes_sorted_t + ids_sorted[:, None, :] * (max_coord + 1.0)

    # 3) Pallas: fused suppressor-outer NMS (O(N^2) mask never hits HBM)
    keep = batched_nms_keep(boxes_nms_t, nms_thresh)
    keep = (keep > 0.5) & (jnp.arange(n_pad)[None, :] < N)

    # 4) scatter the first post_nms_topN kept proposals into the output
    boxes_sorted = jnp.transpose(boxes_sorted_t, (0, 2, 1))       # (B, N_pad, 4)

    def take_topk(keep_i, boxes_i):
        kept_rank = jnp.cumsum(keep_i.astype(jnp.int32)) - 1
        valid = keep_i & (kept_rank < post_nms_topN)
        dst = jnp.where(valid, kept_rank, post_nms_topN)          # overflow dropped
        out = jnp.zeros((post_nms_topN + 1, 4), jnp.float32)
        out = out.at[dst].set(jnp.where(valid[:, None], boxes_i, 0.0))
        return out[:post_nms_topN]

    topk_boxes = jax.vmap(take_topk)(keep, boxes_sorted)          # (B, topN, 4)
    batch_col = jnp.broadcast_to(
        jnp.arange(B, dtype=jnp.float32)[:, None, None], (B, post_nms_topN, 1))
    return jnp.concatenate([batch_col, topk_boxes], axis=-1)      # (B, topN, 5)


# ---------------------------------------------------------------------------
# pure-JAX references (correctness checks only)
# ---------------------------------------------------------------------------
def _decode_clip_ref(im_info, anchors, deltas):
    widths = anchors[..., 2] - anchors[..., 0] + 1.0
    heights = anchors[..., 3] - anchors[..., 1] + 1.0
    ctr_x = anchors[..., 0] + 0.5 * widths
    ctr_y = anchors[..., 1] + 0.5 * heights
    px = deltas[..., 0] * widths + ctr_x
    py = deltas[..., 1] * heights + ctr_y
    pw = jnp.exp(deltas[..., 2]) * widths
    ph = jnp.exp(deltas[..., 3]) * heights
    im_h = im_info[:, 0][:, None]
    im_w = im_info[:, 1][:, None]
    x1 = jnp.clip(px - 0.5 * pw, 0.0, im_w - 1.0)
    y1 = jnp.clip(py - 0.5 * ph, 0.0, im_h - 1.0)
    x2 = jnp.clip(px + 0.5 * pw, 0.0, im_w - 1.0)
    y2 = jnp.clip(py + 0.5 * ph, 0.0, im_h - 1.0)
    return jnp.stack([x1, y1, x2, y2], axis=-1)


def _nms_keep_ref(boxes, nms_thresh):
    # boxes: (B, Np, 4), sorted by descending score, offsets already applied.
    x1, y1, x2, y2 = boxes[..., 0], boxes[..., 1], boxes[..., 2], boxes[..., 3]
    area = (x2 - x1) * (y2 - y1)
    xx1 = jnp.maximum(x1[:, :, None], x1[:, None, :])
    yy1 = jnp.maximum(y1[:, :, None], y1[:, None, :])
    xx2 = jnp.minimum(x2[:, :, None], x2[:, None, :])
    yy2 = jnp.minimum(y2[:, :, None], y2[:, None, :])
    w = jnp.maximum(xx2 - xx1, 0.0)
    h = jnp.maximum(yy2 - yy1, 0.0)
    inter = w * h
    union = area[:, :, None] + area[:, None, :] - inter
    sup = inter > nms_thresh * union
    n = boxes.shape[1]
    idx = jnp.arange(n)

    def greedy(m):
        def body(i, keep):
            suppressed = jnp.any(m[i] & keep & (idx < i))
            return keep.at[i].set(jnp.logical_not(suppressed))
        return jax.lax.fori_loop(0, n, body, jnp.ones((n,), jnp.bool_))

    return jax.vmap(greedy)(sup)


if __name__ == "__main__":
    key = jax.random.PRNGKey(0)
    B = 2
    N = 1000
    feat_shapes = [(24, 24), (12, 12), (6, 6), (3, 3)]   # 2295 anchors total

    anchors_all, level_ids_all = generate_anchors_all_pyramids(
        FPN_ANCHOR_SCALES, ANCHOR_RATIOS, feat_shapes,
        FPN_FEAT_STRIDES, FPN_ANCHOR_STRIDE)
    total = anchors_all.shape[0]

    k1, k2, k3 = jax.random.split(key, 3)
    rpn_rank_inds = jax.random.permutation(k1, total)[:N]
    anchors = jnp.asarray(anchors_all)[rpn_rank_inds]               # (N, 4)
    ids = jnp.asarray(level_ids_all)[rpn_rank_inds]                 # (N,) level ids

    scores_full = jax.random.uniform(k2, (B, N, 2), dtype=jnp.float32)       # input[0]
    bbox_deltas = 0.1 * jax.random.normal(k3, (B, N, 4), dtype=jnp.float32)  # input[1]
    im_info = jnp.array([[96.0, 96.0, 1.0],
                         [80.0, 88.0, 1.0]], dtype=jnp.float32)              # [H, W, s]

    post_nms_topN = CFG["TEST"]["RPN_POST_NMS_TOP_N"]
    nms_thresh = CFG["TEST"]["RPN_NMS_THRESH"]

    n_pad = ((N + _PAD_UNIT - 1) // _PAD_UNIT) * _PAD_UNIT
    pad = n_pad - N

    # --- check 1: Pallas decode+clip vs pure-JAX reference ------------------
    anchors_p = jnp.pad(anchors, ((0, pad), (0, 0)))
    deltas_p = jnp.pad(bbox_deltas, ((0, 0), (0, pad), (0, 0)))
    anchors_t = jnp.transpose(anchors_p, (1, 0))
    deltas_t = jnp.transpose(deltas_p, (0, 2, 1))
    proposals_t = decode_and_clip(im_info, anchors_t, deltas_t)     # (B, 4, N_pad)
    prop_ref = _decode_clip_ref(
        im_info, jnp.broadcast_to(anchors_p[None], (B, n_pad, 4)), deltas_p)
    np.testing.assert_allclose(
        np.asarray(jnp.transpose(proposals_t, (0, 2, 1))), np.asarray(prop_ref),
        rtol=1e-4, atol=1e-3)

    # --- check 2: Pallas fused NMS vs pure-JAX greedy NMS --------------------
    scores_p = jnp.pad(scores_full[:, :, 0], ((0, 0), (0, pad)),
                       constant_values=-jnp.inf)
    ids_p = jnp.pad(ids, (0, pad))
    order = jnp.argsort(-scores_p, axis=1)
    boxes_sorted_t = jnp.take_along_axis(proposals_t, order[:, None, :], axis=2)
    ids_sorted = ids_p[order].astype(jnp.float32)
    max_coord = jnp.max(proposals_t, axis=(1, 2), keepdims=True)
    boxes_nms_t = boxes_sorted_t + ids_sorted[:, None, :] * (max_coord + 1.0)
    keep_pl = batched_nms_keep(boxes_nms_t, nms_thresh)
    keep_ref = _nms_keep_ref(jnp.transpose(boxes_nms_t, (0, 2, 1)), nms_thresh)
    np.testing.assert_array_equal(np.asarray(keep_pl > 0.5), np.asarray(keep_ref))

    # --- full forward --------------------------------------------------------
    out = proposal_layer_fpn_forward(scores_full, bbox_deltas, im_info,
                                     anchors, ids, post_nms_topN, nms_thresh)
    out = jax.block_until_ready(out)
    assert out.shape == (B, post_nms_topN, 5)
    print("KERNEL_OK")
</pallas_src>

<mosaic_0001>
module attributes {stable_mosaic.version = 11 : i64} {
  func.func @_decode_clip_kernel(%arg0: i32, %arg1: i32, %arg2: memref<2x3xf32, #tpu.memory_space<smem>>, %arg3: memref<4x1024xf32, #tpu.memory_space<vmem>>, %arg4: memref<1x4x1024xf32, #tpu.memory_space<vmem>>, %arg5: memref<1x4x1024xf32, #tpu.memory_space<vmem>>) attributes {dimension_semantics = [#tpu.dimension_semantics<parallel>, #tpu.dimension_semantics<parallel>], iteration_bounds = array<i64: 2, 1>, scalar_prefetch = 0 : i64, scratch_operands = 0 : i64, tpu.core_type = #tpu.core_type<tc>, window_params = [{transform_indices = @transform_0, window_bounds = array<i64: 2, 3>}, {transform_indices = @transform_1, window_bounds = array<i64: 4, 1024>}, {transform_indices = @transform_2, window_bounds = array<i64: 1, 4, 1024>}, {transform_indices = @transform_3, window_bounds = array<i64: 1, 4, 1024>}]} {
    %0 = arith.index_cast %arg0 : i32 to index
    %c0 = arith.constant 0 : index
    %1 = memref.load %arg2[%0, %c0] : memref<2x3xf32, #tpu.memory_space<smem>>
    %2 = arith.index_cast %arg0 : i32 to index
    %c1 = arith.constant 1 : index
    %3 = memref.load %arg2[%2, %c1] : memref<2x3xf32, #tpu.memory_space<smem>>
    %c0_0 = arith.constant 0 : index
    %c0_1 = arith.constant 0 : index
    %4 = vector.load %arg3[%c0_0, %c0_1] : memref<4x1024xf32, #tpu.memory_space<vmem>>, vector<1x1024xf32>
    %c1_2 = arith.constant 1 : index
    %c0_3 = arith.constant 0 : index
    %5 = vector.load %arg3[%c1_2, %c0_3] : memref<4x1024xf32, #tpu.memory_space<vmem>>, vector<1x1024xf32>
    %c2 = arith.constant 2 : index
    %c0_4 = arith.constant 0 : index
    %6 = vector.load %arg3[%c2, %c0_4] : memref<4x1024xf32, #tpu.memory_space<vmem>>, vector<1x1024xf32>
    %c3 = arith.constant 3 : index
    %c0_5 = arith.constant 0 : index
    %7 = vector.load %arg3[%c3, %c0_5] : memref<4x1024xf32, #tpu.memory_space<vmem>>, vector<1x1024xf32>
    %c0_6 = arith.constant 0 : index
    %c0_7 = arith.constant 0 : index
    %c0_8 = arith.constant 0 : index
    %8 = vector.load %arg4[%c0_6, %c0_7, %c0_8] : memref<1x4x1024xf32, #tpu.memory_space<vmem>>, vector<1x1x1024xf32>
    %9 = vector.shape_cast %8 : vector<1x1x1024xf32> to vector<1x1024xf32>
    %c0_9 = arith.constant 0 : index
    %c1_10 = arith.constant 1 : index
    %c0_11 = arith.constant 0 : index
    %10 = vector.load %arg4[%c0_9, %c1_10, %c0_11] : memref<1x4x1024xf32, #tpu.memory_space<vmem>>, vector<1x1x1024xf32>
    %11 = vector.shape_cast %10 : vector<1x1x1024xf32> to vector<1x1024xf32>
    %c0_12 = arith.constant 0 : index
    %c2_13 = arith.constant 2 : index
    %c0_14 = arith.constant 0 : index
    %12 = vector.load %arg4[%c0_12, %c2_13, %c0_14] : memref<1x4x1024xf32, #tpu.memory_space<vmem>>, vector<1x1x1024xf32>
    %13 = vector.shape_cast %12 : vector<1x1x1024xf32> to vector<1x1024xf32>
    %c0_15 = arith.constant 0 : index
    %c3_16 = arith.constant 3 : index
    %c0_17 = arith.constant 0 : index
    %14 = vector.load %arg4[%c0_15, %c3_16, %c0_17] : memref<1x4x1024xf32, #tpu.memory_space<vmem>>, vector<1x1x1024xf32>
    %15 = vector.shape_cast %14 : vector<1x1x1024xf32> to vector<1x1024xf32>
    %16 = arith.subf %6, %4 : vector<1x1024xf32>
    %cst = arith.constant 1.000000e+00 : f32
    %17 = vector.broadcast %cst : f32 to vector<1x1024xf32>
    %18 = arith.addf %16, %17 : vector<1x1024xf32>
    %19 = arith.subf %7, %5 : vector<1x1024xf32>
    %cst_18 = arith.constant 1.000000e+00 : f32
    %20 = vector.broadcast %cst_18 : f32 to vector<1x1024xf32>
    %21 = arith.addf %19, %20 : vector<1x1024xf32>
    %cst_19 = arith.constant 5.000000e-01 : f32
    %22 = vector.broadcast %cst_19 : f32 to vector<1x1024xf32>
    %23 = arith.mulf %22, %18 : vector<1x1024xf32>
    %24 = arith.addf %4, %23 : vector<1x1024xf32>
    %cst_20 = arith.constant 5.000000e-01 : f32
    %25 = vector.broadcast %cst_20 : f32 to vector<1x1024xf32>
    %26 = arith.mulf %25, %21 : vector<1x1024xf32>
    %27 = arith.addf %5, %26 : vector<1x1024xf32>
    %28 = arith.mulf %9, %18 : vector<1x1024xf32>
    %29 = arith.addf %28, %24 : vector<1x1024xf32>
    %30 = arith.mulf %11, %21 : vector<1x1024xf32>
    %31 = arith.addf %30, %27 : vector<1x1024xf32>
    %32 = math.exp %13 : vector<1x1024xf32>
    %33 = arith.mulf %32, %18 : vector<1x1024xf32>
    %34 = math.exp %15 : vector<1x1024xf32>
    %35 = arith.mulf %34, %21 : vector<1x1024xf32>
    %cst_21 = arith.constant 5.000000e-01 : f32
    %36 = vector.broadcast %cst_21 : f32 to vector<1x1024xf32>
    %37 = arith.mulf %36, %33 : vector<1x1024xf32>
    %38 = arith.subf %29, %37 : vector<1x1024xf32>
    %cst_22 = arith.constant 1.000000e+00 : f32
    %39 = arith.subf %3, %cst_22 : f32
    %cst_23 = arith.constant 0.000000e+00 : f32
    %40 = vector.broadcast %cst_23 : f32 to vector<1x1024xf32>
    %41 = arith.maximumf %40, %38 : vector<1x1024xf32>
    %42 = vector.broadcast %39 : f32 to vector<1x1024xf32>
    %43 = arith.minimumf %42, %41 : vector<1x1024xf32>
    %c0_24 = arith.constant 0 : index
    %c0_25 = arith.constant 0 : index
    %c0_26 = arith.constant 0 : index
    %44 = vector.load %arg5[%c0_24, %c0_25, %c0_26] : memref<1x4x1024xf32, #tpu.memory_space<vmem>>, vector<1x1x1024xf32>
    %45 = vector.shape_cast %44 : vector<1x1x1024xf32> to vector<1x1024xf32>
    %46 = vector.shape_cast %43 : vector<1x1024xf32> to vector<1x1x1024xf32>
    tpu.vector_store %arg5[%c0_24, %c0_25, %c0_26], %46 {strides = array<i32>} : memref<1x4x1024xf32, #tpu.memory_space<vmem>>, vector<1x1x1024xf32>,
    %cst_27 = arith.constant 5.000000e-01 : f32
    %47 = vector.broadcast %cst_27 : f32 to vector<1x1024xf32>
    %48 = arith.mulf %47, %35 : vector<1x1024xf32>
    %49 = arith.subf %31, %48 : vector<1x1024xf32>
    %cst_28 = arith.constant 1.000000e+00 : f32
    %50 = arith.subf %1, %cst_28 : f32
    %cst_29 = arith.constant 0.000000e+00 : f32
    %51 = vector.broadcast %cst_29 : f32 to vector<1x1024xf32>
    %52 = arith.maximumf %51, %49 : vector<1x1024xf32>
    %53 = vector.broadcast %50 : f32 to vector<1x1024xf32>
    %54 = arith.minimumf %53, %52 : vector<1x1024xf32>
    %c0_30 = arith.constant 0 : index
    %c1_31 = arith.constant 1 : index
    %c0_32 = arith.constant 0 : index
    %55 = vector.load %arg5[%c0_30, %c1_31, %c0_32] : memref<1x4x1024xf32, #tpu.memory_space<vmem>>, vector<1x1x1024xf32>
    %56 = vector.shape_cast %55 : vector<1x1x1024xf32> to vector<1x1024xf32>
    %57 = vector.shape_cast %54 : vector<1x1024xf32> to vector<1x1x1024xf32>
    tpu.vector_store %arg5[%c0_30, %c1_31, %c0_32], %57 {strides = array<i32>} : memref<1x4x1024xf32, #tpu.memory_space<vmem>>, vector<1x1x1024xf32>,
    %cst_33 = arith.constant 5.000000e-01 : f32
    %58 = vector.broadcast %cst_33 : f32 to vector<1x1024xf32>
    %59 = arith.mulf %58, %33 : vector<1x1024xf32>
    %60 = arith.addf %29, %59 : vector<1x1024xf32>
    %cst_34 = arith.constant 1.000000e+00 : f32
    %61 = arith.subf %3, %cst_34 : f32
    %cst_35 = arith.constant 0.000000e+00 : f32
    %62 = vector.broadcast %cst_35 : f32 to vector<1x1024xf32>
    %63 = arith.maximumf %62, %60 : vector<1x1024xf32>
    %64 = vector.broadcast %61 : f32 to vector<1x1024xf32>
    %65 = arith.minimumf %64, %63 : vector<1x1024xf32>
    %c0_36 = arith.constant 0 : index
    %c2_37 = arith.constant 2 : index
    %c0_38 = arith.constant 0 : index
    %66 = vector.load %arg5[%c0_36, %c2_37, %c0_38] : memref<1x4x1024xf32, #tpu.memory_space<vmem>>, vector<1x1x1024xf32>
    %67 = vector.shape_cast %66 : vector<1x1x1024xf32> to vector<1x1024xf32>
    %68 = vector.shape_cast %65 : vector<1x1024xf32> to vector<1x1x1024xf32>
    tpu.vector_store %arg5[%c0_36, %c2_37, %c0_38], %68 {strides = array<i32>} : memref<1x4x1024xf32, #tpu.memory_space<vmem>>, vector<1x1x1024xf32>,
    %cst_39 = arith.constant 5.000000e-01 : f32
    %69 = vector.broadcast %cst_39 : f32 to vector<1x1024xf32>
    %70 = arith.mulf %69, %35 : vector<1x1024xf32>
    %71 = arith.addf %31, %70 : vector<1x1024xf32>
    %cst_40 = arith.constant 1.000000e+00 : f32
    %72 = arith.subf %1, %cst_40 : f32
    %cst_41 = arith.constant 0.000000e+00 : f32
    %73 = vector.broadcast %cst_41 : f32 to vector<1x1024xf32>
    %74 = arith.maximumf %73, %71 : vector<1x1024xf32>
    %75 = vector.broadcast %72 : f32 to vector<1x1024xf32>
    %76 = arith.minimumf %75, %74 : vector<1x1024xf32>
    %c0_42 = arith.constant 0 : index
    %c3_43 = arith.constant 3 : index
    %c0_44 = arith.constant 0 : index
    %77 = vector.load %arg5[%c0_42, %c3_43, %c0_44] : memref<1x4x1024xf32, #tpu.memory_space<vmem>>, vector<1x1x1024xf32>
    %78 = vector.shape_cast %77 : vector<1x1x1024xf32> to vector<1x1024xf32>
    %79 = vector.shape_cast %76 : vector<1x1024xf32> to vector<1x1x1024xf32>
    tpu.vector_store %arg5[%c0_42, %c3_43, %c0_44], %79 {strides = array<i32>} : memref<1x4x1024xf32, #tpu.memory_space<vmem>>, vector<1x1x1024xf32>,
    return
  }
  func.func @transform_0(%arg0: i32, %arg1: i32) -> (i32, i32) {
    %c0_i32 = arith.constant 0 : i32
    %c0_i32_0 = arith.constant 0 : i32
    %c0_i32_1 = arith.constant 0 : i32
    return %c0_i32, %c0_i32_0 : i32, i32
  }
  func.func @transform_1(%arg0: i32, %arg1: i32) -> (i32, i32) {
    %c0_i32 = arith.constant 0 : i32
    %c0_i32_0 = arith.constant 0 : i32
    return %c0_i32, %arg1 : i32, i32
  }
  func.func @transform_2(%arg0: i32, %arg1: i32) -> (i32, i32, i32) {
    %c0_i32 = arith.constant 0 : i32
    %c0_i32_0 = arith.constant 0 : i32
    return %arg0, %c0_i32, %arg1 : i32, i32, i32
  }
  func.func @transform_3(%arg0: i32, %arg1: i32) -> (i32, i32, i32) {
    %c0_i32 = arith.constant 0 : i32
    %c0_i32_0 = arith.constant 0 : i32
    return %arg0, %c0_i32, %arg1 : i32, i32, i32
  }
}

</mosaic_0001>

<llo_original>
// kernel: tpu_custom_call.1
$region0: #{tpu_custom_call.1}
  #allocation0 [shape = 'u32[]', space=smem, size = 0x4, offset = 0x4, fixed_abs, tag = 'smem constant byte address 0x4 - core index']
  #allocation1 [shape = 'u32[144,128]{1,0:T(1,128)}', space=vmem, size = 0x12000, scoped, tag = 'internal scratch']
  %s0 = inlined_call_operand.hbm [shape: f32[2,3], index: 0, kind: input, shape index: {}]
  %s1 = inlined_call_operand.hbm [shape: f32[4,1024], index: 1, kind: input, shape index: {}]
  %s2 = inlined_call_operand.hbm [shape: f32[2,4,1024], index: 2, kind: input, shape index: {}]
  %s3 = inlined_call_operand.hbm [shape: f32[2,4,1024], index: 3, kind: output, shape index: {}]
  %s4 = sld [smem:[#allocation0]]
  $region57: #{tpu_custom_call.1} parent=0
    _
  %s6 = ssub.s32 1, %s4
  %s7 = scalar_select 0, %s6, %s4
  $region1: #{tpu_custom_call.1} parent=0
    #allocation2 [shape = 'u8[1024]{0}', space=smem, size = 0x400, scoped, tag = 'input window, operand 0, single buffered']
    #allocation3 [shape = 's32[2]{0}', space=sflag, size = 0x8, scoped, tag = 'scoped memory for tpu_custom_call.1']
    #allocation4 [shape = 's32[2]{0}', space=sflag, size = 0x8, scoped, tag = 'scoped memory for tpu_custom_call.1']
    #allocation5 [shape = 's32[2]{0}', space=sflag, size = 0x8, scoped, tag = 'scoped memory for tpu_custom_call.1']
    #allocation6 [shape = 'u8[16384]{0}', space=vmem, size = 0x4000, scoped, tag = 'input window, operand 1, single buffered']
    #allocation7 [shape = 'u8[32768]{0}', space=vmem, size = 0x8000, scoped, tag = 'input window, operand 2']
    #allocation8 [shape = 's32[2]{0}', space=sflag, size = 0x8, scoped, tag = 'scoped memory for tpu_custom_call.1']
    #allocation9 [shape = 'u8[32768]{0}', space=vmem, size = 0x8000, scoped, tag = 'output window, operand 0']
    %8 = vsyncpa [#allocation5], 0
    %9 = vsyncpa [#allocation3], 0
    %10 = vsyncpa [#allocation8], 0
    %s11 = scalar_lea.sflag [#allocation8], 1
    %12 = vsyncpa %s11, 0
    %13 = vsyncpa [#allocation4], 0
    %s14 = scalar_lea.sflag [#allocation4], 1
    %15 = vsyncpa %s14, 0
    loop: start=0, step=1, limit=4
    $region2: #{tpu_custom_call.1} parent=1 // loop_pre_header
      _
    $region3: #{tpu_custom_call.1} parent=1 // loop_header
      %s17 = sphi 0, %s21
      %p18 = scmp.ge.s32.totalorder %s17, 4
      %s24 = sphi 0, %s36
      %s25 = sphi 0, %s32
      %s26 = sphi 0, %s24
      %s27 = sphi 0, %s25
      %s28 = sphi 0, %s26
      %s29 = sphi 0, %s27
      %s37 = sphi 0, %s37
      %s39 = sphi 0, %s37
      %s40 = sphi 0, %s39
      %s54 = sphi 0, %s40
      %s60 = sphi 0, %s62
      %s63 = sphi 0, %s60
      %s64 = sphi 0, %s63
      %s80 = sphi 0, %s64
      %s88 = sphi 0, %s90
      %s91 = sphi 0, %s88
      %s92 = sphi 0, %s91
      %s108 = sphi 0, %s92
      %s116 = sphi 0, %s118
      %s119 = sphi 0, %s116
      %s120 = sphi 0, %s119
      %s136 = sphi 0, %s120
    $region4: #{tpu_custom_call.1} parent=1 // loop_header_branch
      %20 = sbr.rel (%p18) target = $region8
    $region5: #{tpu_custom_call.1} parent=1 // loop_body
      %s22 = ssub.s32 %s17, 1
      %s23 = ssub.s32 %s17, 2
      %s30 = sadd.s32 1, %s25
      %p31 = scmp.ge.s32.totalorder %s30, 1
      %s32 = scalar_select %p31, 0, %s30
      %s33 = sadd.s32 1, %s24
      %s34 = scalar_select %p31, %s33, %s24
      %p35 = scmp.ge.s32.totalorder %s34, 2
      %s36 = scalar_select %p35, 0, %s34
      %s38 = sadd.s32 %s37, 1
      %p41 = scmp.eq.s32.totalorder %s17, 1
      %p42 = scmp.ne.s32.totalorder %s37, %s39
      %p43 = scmp.eq.s32.totalorder %s17, 0
      %p44 = por %p42, %p43
      %p45 = scmp.ne.s32.totalorder %s37, %s39
      %p46 = scmp.eq.s32.totalorder %s22, 1
      %p47 = por %p45, %p46
      %p48 = scmp.ne.s32.totalorder %s39, %s40
      %p49 = scmp.eq.s32.totalorder %s22, 0
      %p50 = por %p48, %p49
      %p51 = scmp.ne.s32.totalorder %s39, %s40
      %p52 = scmp.eq.s32.totalorder %s23, 1
      %p53 = por %p51, %p52
      %p55 = scmp.ne.s32.totalorder %s40, %s54
      %p56 = scmp.eq.s32.totalorder %s23, 0
      %p57 = por %p55, %p56
      %s58 = ssub.s32 %s25, %s32
      %p59 = scmp.eq.s32.totalorder %s58, 0
      %s61 = sadd.s32 %s60, 1
      %s62 = scalar_select %p59, %s60, %s61
      %p65 = pneg %p59
      %p66 = scmp.eq.s32.totalorder %s17, 1
      %p67 = por %p65, %p66
      %p68 = scmp.ne.s32.totalorder %s60, %s63
      %p69 = scmp.eq.s32.totalorder %s17, 0
      %p70 = por %p68, %p69
      %p71 = scmp.ne.s32.totalorder %s60, %s63
      %p72 = scmp.eq.s32.totalorder %s22, 1
      %p73 = por %p71, %p72
      %p74 = scmp.ne.s32.totalorder %s63, %s64
      %p75 = scmp.eq.s32.totalorder %s22, 0
      %p76 = por %p74, %p75
      %p77 = scmp.ne.s32.totalorder %s63, %s64
      %p78 = scmp.eq.s32.totalorder %s23, 1
      %p79 = por %p77, %p78
      %p81 = scmp.ne.s32.totalorder %s64, %s80
      %p82 = scmp.eq.s32.totalorder %s23, 0
      %p83 = por %p81, %p82
      %s84 = ssub.s32 %s24, %s36
      %s85 = ssub.s32 %s25, %s32
      %s86 = sor.u32 %s84, %s85
      %p87 = scmp.eq.s32.totalorder %s86, 0
      %s89 = sadd.s32 %s88, 1
      %s90 = scalar_select %p87, %s88, %s89
      %p93 = pneg %p87
      %p94 = scmp.eq.s32.totalorder %s17, 1
      %p95 = por %p93, %p94
      %p96 = scmp.ne.s32.totalorder %s88, %s91
      %p97 = scmp.eq.s32.totalorder %s17, 0
      %p98 = por %p96, %p97
      %p99 = scmp.ne.s32.totalorder %s88, %s91
      %p100 = scmp.eq.s32.totalorder %s22, 1
      %p101 = por %p99, %p100
      %p102 = scmp.ne.s32.totalorder %s91, %s92
      %p103 = scmp.eq.s32.totalorder %s22, 0
      %p104 = por %p102, %p103
      %p105 = scmp.ne.s32.totalorder %s91, %s92
      %p106 = scmp.eq.s32.totalorder %s23, 1
      %p107 = por %p105, %p106
      %p109 = scmp.ne.s32.totalorder %s92, %s108
      %p110 = scmp.eq.s32.totalorder %s23, 0
      %p111 = por %p109, %p110
      %s112 = ssub.s32 %s24, %s36
      %s113 = ssub.s32 %s25, %s32
      %s114 = sor.u32 %s112, %s113
      %p115 = scmp.eq.s32.totalorder %s114, 0
      %s117 = sadd.s32 %s116, 1
      %s118 = scalar_select %p115, %s116, %s117
      %p121 = pneg %p115
      %p122 = scmp.eq.s32.totalorder %s17, 1
      %p123 = por %p121, %p122
      %p124 = scmp.ne.s32.totalorder %s116, %s119
      %p125 = scmp.eq.s32.totalorder %s17, 0
      %p126 = por %p124, %p125
      %p127 = scmp.ne.s32.totalorder %s116, %s119
      %p128 = scmp.eq.s32.totalorder %s22, 1
      %p129 = por %p127, %p128
      %p130 = scmp.ne.s32.totalorder %s119, %s120
      %p131 = scmp.eq.s32.totalorder %s22, 0
      %p132 = por %p130, %p131
      %p133 = scmp.ne.s32.totalorder %s119, %s120
      %p134 = scmp.eq.s32.totalorder %s23, 1
      %p135 = por %p133, %p134
      %p137 = scmp.ne.s32.totalorder %s120, %s136
      %p138 = scmp.eq.s32.totalorder %s23, 0
      %p139 = por %p137, %p138
      %p140 = scmp.le.s32.totalorder 1, %s17
      %p141 = scmp.lt.s32.totalorder %s17, 3
      %p142 = pnand %p140, %p141
      %p143 = pneg %p142
      // Predicated region
      $region9: #{tpu_custom_call.1} parent=5 // pred_check
        _
      $region10: #{tpu_custom_call.1} parent=5 // pred_check_branch
        %145 = sbr.rel (%p142) target = $region12
      $region11: #{tpu_custom_call.1} parent=5 // pred_region
        %s146 = ssub.s32 %s17, 1
        // Predicated region
        $region13: #{tpu_custom_call.1} parent=11 // pred_check
          %p147 = pneg %p50
        $region14: #{tpu_custom_call.1} parent=11 // pred_check_branch
          %149 = sbr.rel (%p147) target = $region16
        $region15: #{tpu_custom_call.1} parent=11 // pred_region
          %s151 = ssub.s32 32, 32
          %152 = vsyncadd [#allocation5], %s151
          %155 = dma.hbm_to_smem %s0, 32, [#allocation2], [#allocation5]
        $region16: #{tpu_custom_call.1} parent=11 // pred_fallthru
          _
        // Predicated region
        $region17: #{tpu_custom_call.1} parent=11 // pred_check
          %p156 = pneg %p76
        $region18: #{tpu_custom_call.1} parent=11 // pred_check_branch
          %158 = sbr.rel (%p156) target = $region20
        $region19: #{tpu_custom_call.1} parent=11 // pred_region
          %s159 = smul.u32 8, %s27
          %s161 = ssub.s32 512, 512
          %162 = vsyncadd [#allocation3], %s161
          %s163 = smul.addr %s159, 64
          %s164 = scalar_lea.hbm %s1, %s163
          %s166 = sshll.u32 [#allocation6], 4
          %s167 = int_to_ptr.vmem [resolvable:$true] %s166
          %169 = dma.hbm_to_vmem [thread:$0]  %s164, 512, %s167, [#allocation3]
        $region20: #{tpu_custom_call.1} parent=11 // pred_fallthru
          _
      $region12: #{tpu_custom_call.1} parent=5 // pred_fallthru
        _
      %p170 = scmp.lt.s32.totalorder %s17, 2
      // Predicated region
      $region21: #{tpu_custom_call.1} parent=5 // pred_check
        %p171 = pneg %p170
      $region22: #{tpu_custom_call.1} parent=5 // pred_check_branch
        %173 = sbr.rel (%p171) target = $region24
      $region23: #{tpu_custom_call.1} parent=5 // pred_region
        // Predicated region
        $region25: #{tpu_custom_call.1} parent=23 // pred_check
          %p174 = pneg %p98
        $region26: #{tpu_custom_call.1} parent=23 // pred_check_branch
          %176 = sbr.rel (%p174) target = $region28
        $region27: #{tpu_custom_call.1} parent=23 // pred_region
          %s177 = sand.u32 %s88, 1
          %s178 = scalar_lea.sflag [#allocation8], %s177
          %s179 = sand.u32 %s88, 1
          %s180 = smul.addr %s179, 32
          %s181 = scalar_lea.vmem [#allocation7], %s180
          %s182 = smul.u32 8, %s25
          %s184 = ssub.s32 512, 512
          %185 = vsyncadd %s178, %s184
          %s186 = smul.addr %s24, 8
          %s187 = sadd.s32 %s182, %s186
          %s188 = smul.addr %s187, 64
          %s189 = scalar_lea.hbm %s2, %s188
          %s191 = sshll.u32 %s181, 4
          %s192 = int_to_ptr.vmem [resolvable:$true] %s191
          %194 = dma.hbm_to_vmem [thread:$0]  %s189, 512, %s192, %s178
        $region28: #{tpu_custom_call.1} parent=23 // pred_fallthru
          _
      $region24: #{tpu_custom_call.1} parent=5 // pred_fallthru
        _
      %p195 = scmp.le.s32.totalorder 1, %s17
      %p196 = scmp.lt.s32.totalorder %s17, 3
      %p197 = pnand %p195, %p196
      %p198 = pneg %p197
      // Predicated region
      $region29: #{tpu_custom_call.1} parent=5 // pred_check
        _
      $region30: #{tpu_custom_call.1} parent=5 // pred_check_branch
        %200 = sbr.rel (%p197) target = $region32
      $region31: #{tpu_custom_call.1} parent=5 // pred_region
        %s201 = ssub.s32 %s17, 1
        // Predicated region
        $region33: #{tpu_custom_call.1} parent=31 // pred_check
          %p202 = pneg %p50
        $region34: #{tpu_custom_call.1} parent=31 // pred_check_branch
          %204 = sbr.rel (%p202) target = $region36
        $region35: #{tpu_custom_call.1} parent=31 // pred_region
          %205 = dma.done [#allocation5], 32
        $region36: #{tpu_custom_call.1} parent=31 // pred_fallthru
          _
        // Predicated region
        $region37: #{tpu_custom_call.1} parent=31 // pred_check
          %p206 = pneg %p76
        $region38: #{tpu_custom_call.1} parent=31 // pred_check_branch
          %208 = sbr.rel (%p206) target = $region40
        $region39: #{tpu_custom_call.1} parent=31 // pred_region
          %209 = dma.done [#allocation3], 512
        $region40: #{tpu_custom_call.1} parent=31 // pred_fallthru
          _
        %s210 = sand.u32 %s91, 1
        %s211 = scalar_lea.sflag [#allocation8], %s210
        %s212 = sand.u32 %s91, 1
        %s213 = smul.addr %s212, 32
        %s214 = scalar_lea.vmem [#allocation7], %s213
        // Predicated region
        $region41: #{tpu_custom_call.1} parent=31 // pred_check
          %p215 = pneg %p104
        $region42: #{tpu_custom_call.1} parent=31 // pred_check_branch
          %217 = sbr.rel (%p215) target = $region44
        $region43: #{tpu_custom_call.1} parent=31 // pred_region
          %218 = dma.done %s211, 512
        $region44: #{tpu_custom_call.1} parent=31 // pred_fallthru
          _
        %219 = sfence
        %p220 = pneg %p50
        %p221 = pneg %p47
        %p222 = pneg %p76
        %p223 = pneg %p73
        %s224 = sand.u32 %s91, 1
        %s225 = scalar_lea.sflag [#allocation8], %s224
        %s226 = sand.u32 %s91, 1
        %s227 = smul.addr %s226, 32
        %s228 = scalar_lea.vmem [#allocation7], %s227
        %p229 = pneg %p104
        %p230 = pneg %p101
        %p231 = pneg %p132
        %p232 = pneg %p129
        %s233 = sand.u32 %s119, 1
        %s234 = scalar_lea.sflag [#allocation4], %s233
        %s235 = sand.u32 %s119, 1
        %s236 = smul.addr %s235, 32
        %s237 = scalar_lea.vmem [#allocation9], %s236
        %s238 = smul.u32 8, %s27
        %s239 = smul.u32 8, %s27
        %s240 = smul.u32 8, %s27
        %s241 = smul.u32 %s26, 128
        %s242 = sld [smem:[#allocation2 + %s241]]
        %s243 = sadd.s32 %s241, 1
        %s244 = sld [smem:[#allocation2 + %s243]]
        %v245 = vld [vmem:[#allocation6] ss:$4 sm:$0xff]
        %s246 = scalar_lea.vmem [#allocation6], 1
        %v247 = vld [vmem:[%s246] ss:$4 sm:$0xff]
        %s248 = scalar_lea.vmem [#allocation6], 2
        %v249 = vld [vmem:[%s248] ss:$4 sm:$0xff]
        %s250 = scalar_lea.vmem [#allocation6], 3
        %v251 = vld [vmem:[%s250] ss:$4 sm:$0xff]
        %v252 = vld [vmem:[%s214] ss:$4 sm:$0xff]
        %s253 = scalar_lea.vmem %s214, 1 [#allocation7]
        %v254 = vld [vmem:[%s253] ss:$4 sm:$0xff]
        %s255 = scalar_lea.vmem %s214, 2 [#allocation7]
        %v256 = vld [vmem:[%s255] ss:$4 sm:$0xff]
        %s257 = scalar_lea.vmem %s214, 3 [#allocation7]
        %v258 = vld [vmem:[%s257] ss:$4 sm:$0xff]
        %v259 = vsub.f32 %v249, %v245
        %v260 = vadd.f32 %v259, 1.0
        %v261 = vsub.f32 %v251, %v247
        %v262 = vadd.f32 %v261, 1.0
        %v263 = vmul.f32 %v260, 0.5
        %v264 = vadd.f32 %v245, %v263
        %v265 = vmul.f32 %v262, 0.5
        %v266 = vadd.f32 %v247, %v265
        %v267 = vmul.f32 %v252, %v260
        %v268 = vadd.f32 %v267, %v264
        %v269 = vmul.f32 %v254, %v262
        %v270 = vadd.f32 %v269, %v266
        %v271 = vmul.f32 %v256, 1.442695
        %v272 = vpow.pop %v271
        %v273 = vmul.f32 %v272, %v260
        %v274 = vmul.f32 %v258, 1.442695
        %v275 = vpow.pop %v274
        %v276 = vmul.f32 %v275, %v262
        %v277 = vmul.f32 %v273, 0.5
        %v278 = vsub.f32 %v268, %v277
        %s279 = ssub.f32 %s244, 1.0
        %v280 = vmax.f32 %v278, 0.0
        %v281 = vstv %s279
        %v282 = vmin.f32 %v281, %v280
        %283 = vst [vmem:[%s237] ss:$4 sm:$0xff] %v282
        %v284 = vmul.f32 %v276, 0.5
        %v285 = vsub.f32 %v270, %v284
        %s286 = ssub.f32 %s242, 1.0
        %v287 = vmax.f32 %v285, 0.0
        %v288 = vstv %s286
        %v289 = vmin.f32 %v288, %v287
        %s290 = scalar_lea.vmem %s237, 1 [#allocation9]
        %291 = vst [vmem:[%s290] ss:$4 sm:$0xff] %v289
        %v292 = vadd.f32 %v268, %v277
        %v293 = vmax.f32 %v292, 0.0
        %v294 = vmin.f32 %v281, %v293
        %s295 = scalar_lea.vmem %s237, 2 [#allocation9]
        %296 = vst [vmem:[%s295] ss:$4 sm:$0xff] %v294
        %v297 = vadd.f32 %v270, %v284
        %v298 = vmax.f32 %v297, 0.0
        %v299 = vmin.f32 %v288, %v298
        %s300 = scalar_lea.vmem %s237, 3 [#allocation9]
        %301 = vst [vmem:[%s300] ss:$4 sm:$0xff] %v299
        %s302 = sand.u32 %s119, 1
        %s303 = scalar_lea.sflag [#allocation4], %s302
        %s304 = sand.u32 %s119, 1
        %s305 = smul.addr %s304, 32
        %s306 = scalar_lea.vmem [#allocation9], %s305
        // Predicated region
        $region45: #{tpu_custom_call.1} parent=31 // pred_check
          %p307 = pneg %p129
        $region46: #{tpu_custom_call.1} parent=31 // pred_check_branch
          %309 = sbr.rel (%p307) target = $region48
        $region47: #{tpu_custom_call.1} parent=31 // pred_region
          %s310 = smul.u32 8, %s27
          %s312 = ssub.s32 512, 512
          %313 = vsyncadd %s303, %s312
          %s314 = smul.addr %s26, 8
          %s315 = sadd.s32 %s310, %s314
          %s316 = smul.addr %s315, 64
          %s317 = scalar_lea.hbm %s3, %s316
          %s319 = sshll.u32 %s306, 4
          %s320 = int_to_ptr.vmem [resolvable:$true] %s319
          %322 = dma.vmem_to_hbm [thread:$0]  %s320, 512, %s317, %s303
        $region48: #{tpu_custom_call.1} parent=31 // pred_fallthru
          _
      $region32: #{tpu_custom_call.1} parent=5 // pred_fallthru
        _
      %p323 = scmp.le.s32.totalorder 2, %s17
      // Predicated region
      $region49: #{tpu_custom_call.1} parent=5 // pred_check
        %p324 = pneg %p323
      $region50: #{tpu_custom_call.1} parent=5 // pred_check_branch
        %326 = sbr.rel (%p324) target = $region52
      $region51: #{tpu_custom_call.1} parent=5 // pred_region
        %s327 = ssub.s32 %s17, 2
        // Predicated region
        $region53: #{tpu_custom_call.1} parent=51 // pred_check
          %p328 = pneg %p135
        $region54: #{tpu_custom_call.1} parent=51 // pred_check_branch
          %330 = sbr.rel (%p328) target = $region56
        $region55: #{tpu_custom_call.1} parent=51 // pred_region
          %s331 = sand.u32 %s120, 1
          %s332 = scalar_lea.sflag [#allocation4], %s331
          %s333 = sand.u32 %s120, 1
          %s334 = smul.addr %s333, 32
          %s335 = scalar_lea.vmem [#allocation9], %s334
          %336 = dma.done %s332, 512
        $region56: #{tpu_custom_call.1} parent=51 // pred_fallthru
          _
      $region52: #{tpu_custom_call.1} parent=5 // pred_fallthru
        _
    $region6: #{tpu_custom_call.1} parent=1 // loop_footer
      %s21 = sadd.s32 1, %s17
    $region7: #{tpu_custom_call.1} parent=1 // loop_footer_branch
      %16 = sbr.rel target = $region3
    $region8: #{tpu_custom_call.1} parent=1 // loop_exit
      _
    %337 = vsyncpa [#allocation3], 1
    %s338 = scalar_lea.sflag [#allocation3], 1
    %339 = vsyncpa %s338, 1
    %340 = vsyncpa [#allocation8], 1
    %s341 = scalar_lea.sflag [#allocation8], 1
    %342 = vsyncpa %s341, 1
    %343 = vsyncpa [#allocation4], 1
    %s344 = scalar_lea.sflag [#allocation4], 1
    %345 = vsyncpa %s344, 1
    %346 = vsyncpa [#allocation5], 1
    %s347 = scalar_lea.sflag [#allocation5], 1
    %348 = vsyncpa %s347, 1

</llo_original>
